<compile_context>
chip_gen: v6e
topology: v6e:2x2x1
jax: 0.10.0
libtpu: 0.0.40
codegen_flags: <defaults>
</compile_context>

<pallas_src>
import jax
import jax.numpy as jnp
from jax import lax
from jax.experimental import pallas as pl
from jax.experimental.pallas import tpu as pltpu


def _patch_merging_kernel(x_ref, ge_ref, go_ref, be_ref, bo_ref,
                          we_ref, wo_ref, o_ref):
    # x_ref block: (tr, 2, Wo, 2C)   [even row slab, odd row slab]
    tr, _, wo, c2 = x_ref.shape
    m = tr * wo

    xe = x_ref[:, 0, :, :].reshape(m, c2).astype(jnp.float32)   # (m, 2C)
    xo = x_ref[:, 1, :, :].reshape(m, c2).astype(jnp.float32)   # (m, 2C)

    # LayerNorm over the (virtual) 4C concat, computed on the two halves.
    inv_k = 1.0 / (2.0 * c2)                                    # 1 / (4C)
    mean = (jnp.sum(xe, -1, keepdims=True)
            + jnp.sum(xo, -1, keepdims=True)) * inv_k
    ce = xe - mean
    co = xo - mean
    var = (jnp.sum(ce * ce, -1, keepdims=True)
           + jnp.sum(co * co, -1, keepdims=True)) * inv_k
    inv = lax.rsqrt(var + 1e-5)                                 # torch LN eps

    he = (ce * inv) * ge_ref[...] + be_ref[...]                 # (m, 2C) f32
    ho = (co * inv) * go_ref[...] + bo_ref[...]

    # Linear(4C -> 2C, bias=False) as two half-K matmuls, f32 accumulation.
    acc = jnp.dot(he.astype(jnp.bfloat16), we_ref[...],
                  preferred_element_type=jnp.float32)
    acc = acc + jnp.dot(ho.astype(jnp.bfloat16), wo_ref[...],
                        preferred_element_type=jnp.float32)
    o_ref[...] = acc.astype(o_ref.dtype)


def _pick_tr(R, Wo, target_rows=512):
    """Largest divisor tr of R with tr*Wo <= target_rows and tr*Wo % 8 == 0,
    preferring >= 2 (and even) grid steps for v7x's two TensorCores."""
    divs = [d for d in range(1, R + 1) if R % d == 0]
    good = [d for d in divs if (d * Wo) % 8 == 0 and d * Wo <= target_rows]
    pref = [d for d in good if R // d >= 2]
    even = [d for d in pref if (R // d) % 2 == 0]
    if even:
        return max(even)
    if pref:
        return max(pref)
    if good:
        return max(good)
    return R   # single full block (tiny inputs); (8,128) rule satisfied by full dims


def patch_merging(x, input_resolution, gamma, beta, w_red, *, target_rows=512):
    """x: (B, H*W, C).  gamma/beta: (4C,) LayerNorm params.
    w_red: (2C, 4C) torch Linear weight (out, in), bias=False.
    Returns (B, (H//2)*(W//2), 2C)."""
    H, W = input_resolution
    B, L, C = x.shape
    assert L == H * W, "input feature has wrong size"
    assert H % 2 == 0 and W % 2 == 0, "H, W must be even"
    Ho, Wo = H // 2, W // 2
    K, N = 4 * C, 2 * C
    R = B * Ho
    M = R * Wo

    # Kernel K-layout is [even-row: (col0, col1)·C | odd-row: (col0, col1)·C]
    # = [x0, x2, x1, x3]; module layout is [x0, x1, x2, x3].  Permute params.
    a = jnp.arange(C)
    perm = jnp.concatenate([a, 2 * C + a, C + a, 3 * C + a])
    g = gamma.astype(jnp.float32)[perm]
    b = beta.astype(jnp.float32)[perm]
    wk = w_red.T[perm, :]                                      # (K, N)

    # Lane-dense output: pad N up to a multiple of 128 (zero columns).
    Npad = ((N + 127) // 128) * 128
    if Npad != N:
        wk = jnp.pad(wk, ((0, 0), (0, Npad - N)))
    wk = wk.astype(jnp.bfloat16)
    w_even, w_odd = wk[:N], wk[N:]                             # (2C, Npad) each
    ge, go = g[:N].reshape(1, N), g[N:].reshape(1, N)
    be, bo = b[:N].reshape(1, N), b[N:].reshape(1, N)

    # Free reshape (contiguous): (B, H*W, C) -> (B*Ho, 2, Wo, 2C).
    xr = x.reshape(R, 2, Wo, 2 * C)

    tr = _pick_tr(R, Wo, target_rows)
    grid = (R // tr,)

    x_spec = pl.BlockSpec((tr, 2, Wo, 2 * C), lambda i: (i, 0, 0, 0))
    v_spec = pl.BlockSpec((1, N), lambda i: (0, 0))
    w_spec = pl.BlockSpec((N, Npad), lambda i: (0, 0))
    o_spec = pl.BlockSpec((tr * Wo, Npad), lambda i: (i, 0))

    out = pl.pallas_call(
        _patch_merging_kernel,
        out_shape=jax.ShapeDtypeStruct((M, Npad), x.dtype),
        grid_spec=pltpu.PrefetchScalarGridSpec(
            num_scalar_prefetch=0,
            grid=grid,
            in_specs=[x_spec, v_spec, v_spec, v_spec, v_spec, w_spec, w_spec],
            out_specs=o_spec,
        ),
        compiler_params=pltpu.CompilerParams(
            dimension_semantics=("parallel",)),
    )(xr, ge, go, be, bo, w_even, w_odd)

    if Npad != N:
        out = out[:, :N]
    return out.reshape(B, Ho * Wo, N)


def _reference(x, input_resolution, gamma, beta, w_red):
    """Plain-JAX f32 reference mirroring the PyTorch forward."""
    H, W = input_resolution
    B, L, C = x.shape
    xi = x.astype(jnp.float32).reshape(B, H, W, C)
    x0 = xi[:, 0::2, 0::2, :]
    x1 = xi[:, 1::2, 0::2, :]
    x2 = xi[:, 0::2, 1::2, :]
    x3 = xi[:, 1::2, 1::2, :]
    xc = jnp.concatenate([x0, x1, x2, x3], -1).reshape(B, -1, 4 * C)
    mean = jnp.mean(xc, -1, keepdims=True)
    var = jnp.mean((xc - mean) ** 2, -1, keepdims=True)
    xn = (xc - mean) / jnp.sqrt(var + 1e-5)
    xn = xn * gamma.astype(jnp.float32) + beta.astype(jnp.float32)
    return xn @ w_red.T.astype(jnp.float32)


if __name__ == "__main__":
    # Small config consistent with the module: resolution 16x16, dim C=32.
    B, H, W, C = 2, 16, 16, 32

    key = jax.random.PRNGKey(0)
    kx, kg, kb, kw = jax.random.split(key, 4)
    x = jax.random.normal(kx, (B, H * W, C), dtype=jnp.float32)
    gamma = 1.0 + 0.1 * jax.random.normal(kg, (4 * C,), dtype=jnp.float32)
    beta = 0.1 * jax.random.normal(kb, (4 * C,), dtype=jnp.float32)
    w_red = 0.05 * jax.random.normal(kw, (2 * C, 4 * C), dtype=jnp.float32)

    out = patch_merging(x, (H, W), gamma, beta, w_red)
    out = jax.block_until_ready(out)
    ref = _reference(x, (H, W), gamma, beta, w_red)

    assert out.shape == (B, (H // 2) * (W // 2), 2 * C)
    # bf16 MXU operands with f32 accumulation -> mixed-precision tolerance.
    assert jnp.allclose(out, ref, atol=3e-2, rtol=3e-2)
    print("KERNEL_OK")
</pallas_src>

<mosaic_0001>
module attributes {stable_mosaic.version = 11 : i64} {
  func.func @_patch_merging_kernel(%arg0: i32, %arg1: memref<8x2x8x64xf32, #tpu.memory_space<vmem>>, %arg2: memref<1x64xf32, #tpu.memory_space<vmem>>, %arg3: memref<1x64xf32, #tpu.memory_space<vmem>>, %arg4: memref<1x64xf32, #tpu.memory_space<vmem>>, %arg5: memref<1x64xf32, #tpu.memory_space<vmem>>, %arg6: memref<64x128xbf16, #tpu.memory_space<vmem>>, %arg7: memref<64x128xbf16, #tpu.memory_space<vmem>>, %arg8: memref<64x128xf32, #tpu.memory_space<vmem>>) attributes {dimension_semantics = [#tpu.dimension_semantics<parallel>], iteration_bounds = array<i64: 2>, scalar_prefetch = 0 : i64, scratch_operands = 0 : i64, tpu.core_type = #tpu.core_type<tc>, window_params = [{transform_indices = @transform_0, window_bounds = array<i64: 8, 2, 8, 64>}, {pipeline_mode = #tpu.pipeline_mode<synchronous>, transform_indices = @transform_1, window_bounds = array<i64: 1, 64>}, {pipeline_mode = #tpu.pipeline_mode<synchronous>, transform_indices = @transform_2, window_bounds = array<i64: 1, 64>}, {pipeline_mode = #tpu.pipeline_mode<synchronous>, transform_indices = @transform_3, window_bounds = array<i64: 1, 64>}, {pipeline_mode = #tpu.pipeline_mode<synchronous>, transform_indices = @transform_4, window_bounds = array<i64: 1, 64>}, {pipeline_mode = #tpu.pipeline_mode<synchronous>, transform_indices = @transform_5, window_bounds = array<i64: 64, 128>}, {pipeline_mode = #tpu.pipeline_mode<synchronous>, transform_indices = @transform_6, window_bounds = array<i64: 64, 128>}, {transform_indices = @transform_7, window_bounds = array<i64: 64, 128>}]} {
    %c0 = arith.constant 0 : index
    %c0_0 = arith.constant 0 : index
    %c0_1 = arith.constant 0 : index
    %c0_2 = arith.constant 0 : index
    %0 = vector.load %arg1[%c0, %c0_0, %c0_1, %c0_2] : memref<8x2x8x64xf32, #tpu.memory_space<vmem>>, vector<8x1x8x64xf32>
    %1 = vector.shape_cast %0 : vector<8x1x8x64xf32> to vector<8x8x64xf32>
    %2 = vector.shape_cast %1 : vector<8x8x64xf32> to vector<64x64xf32>
    %c0_3 = arith.constant 0 : index
    %c1 = arith.constant 1 : index
    %c0_4 = arith.constant 0 : index
    %c0_5 = arith.constant 0 : index
    %3 = vector.load %arg1[%c0_3, %c1, %c0_4, %c0_5] : memref<8x2x8x64xf32, #tpu.memory_space<vmem>>, vector<8x1x8x64xf32>
    %4 = vector.shape_cast %3 : vector<8x1x8x64xf32> to vector<8x8x64xf32>
    %5 = vector.shape_cast %4 : vector<8x8x64xf32> to vector<64x64xf32>
    %cst = arith.constant dense<0.000000e+00> : vector<64xf32>
    %6 = vector.multi_reduction <add>, %2, %cst [1] : vector<64x64xf32> to vector<64xf32>
    %7 = vector.shape_cast %6 : vector<64xf32> to vector<64x1xf32>
    %cst_6 = arith.constant dense<0.000000e+00> : vector<64xf32>
    %8 = vector.multi_reduction <add>, %5, %cst_6 [1] : vector<64x64xf32> to vector<64xf32>
    %9 = vector.shape_cast %8 : vector<64xf32> to vector<64x1xf32>
    %10 = arith.addf %7, %9 : vector<64x1xf32>
    %cst_7 = arith.constant 7.812500e-03 : f32
    %11 = vector.broadcast %cst_7 : f32 to vector<64x1xf32>
    %12 = arith.mulf %10, %11 : vector<64x1xf32>
    %13 = vector.broadcast %12 : vector<64x1xf32> to vector<64x64xf32>
    %14 = arith.subf %2, %13 : vector<64x64xf32>
    %15 = vector.broadcast %12 : vector<64x1xf32> to vector<64x64xf32>
    %16 = arith.subf %5, %15 : vector<64x64xf32>
    %17 = arith.mulf %14, %14 : vector<64x64xf32>
    %cst_8 = arith.constant dense<0.000000e+00> : vector<64xf32>
    %18 = vector.multi_reduction <add>, %17, %cst_8 [1] : vector<64x64xf32> to vector<64xf32>
    %19 = vector.shape_cast %18 : vector<64xf32> to vector<64x1xf32>
    %20 = arith.mulf %16, %16 : vector<64x64xf32>
    %cst_9 = arith.constant dense<0.000000e+00> : vector<64xf32>
    %21 = vector.multi_reduction <add>, %20, %cst_9 [1] : vector<64x64xf32> to vector<64xf32>
    %22 = vector.shape_cast %21 : vector<64xf32> to vector<64x1xf32>
    %23 = arith.addf %19, %22 : vector<64x1xf32>
    %cst_10 = arith.constant 7.812500e-03 : f32
    %24 = vector.broadcast %cst_10 : f32 to vector<64x1xf32>
    %25 = arith.mulf %23, %24 : vector<64x1xf32>
    %cst_11 = arith.constant 9.99999974E-6 : f32
    %26 = vector.broadcast %cst_11 : f32 to vector<64x1xf32>
    %27 = arith.addf %25, %26 : vector<64x1xf32>
    %28 = math.rsqrt %27 : vector<64x1xf32>
    %29 = vector.broadcast %28 : vector<64x1xf32> to vector<64x64xf32>
    %30 = arith.mulf %14, %29 : vector<64x64xf32>
    %c0_12 = arith.constant 0 : index
    %c0_13 = arith.constant 0 : index
    %31 = vector.load %arg2[%c0_12, %c0_13] : memref<1x64xf32, #tpu.memory_space<vmem>>, vector<1x64xf32>
    %32 = vector.broadcast %31 : vector<1x64xf32> to vector<64x64xf32>
    %33 = arith.mulf %30, %32 : vector<64x64xf32>
    %c0_14 = arith.constant 0 : index
    %c0_15 = arith.constant 0 : index
    %34 = vector.load %arg4[%c0_14, %c0_15] : memref<1x64xf32, #tpu.memory_space<vmem>>, vector<1x64xf32>
    %35 = vector.broadcast %34 : vector<1x64xf32> to vector<64x64xf32>
    %36 = arith.addf %33, %35 : vector<64x64xf32>
    %37 = vector.broadcast %28 : vector<64x1xf32> to vector<64x64xf32>
    %38 = arith.mulf %16, %37 : vector<64x64xf32>
    %c0_16 = arith.constant 0 : index
    %c0_17 = arith.constant 0 : index
    %39 = vector.load %arg3[%c0_16, %c0_17] : memref<1x64xf32, #tpu.memory_space<vmem>>, vector<1x64xf32>
    %40 = vector.broadcast %39 : vector<1x64xf32> to vector<64x64xf32>
    %41 = arith.mulf %38, %40 : vector<64x64xf32>
    %c0_18 = arith.constant 0 : index
    %c0_19 = arith.constant 0 : index
    %42 = vector.load %arg5[%c0_18, %c0_19] : memref<1x64xf32, #tpu.memory_space<vmem>>, vector<1x64xf32>
    %43 = vector.broadcast %42 : vector<1x64xf32> to vector<64x64xf32>
    %44 = arith.addf %41, %43 : vector<64x64xf32>
    %45 = arith.truncf %36 : vector<64x64xf32> to vector<64x64xbf16>
    %c0_20 = arith.constant 0 : index
    %c0_21 = arith.constant 0 : index
    %46 = vector.load %arg6[%c0_20, %c0_21] : memref<64x128xbf16, #tpu.memory_space<vmem>>, vector<64x128xbf16>
    %cst_22 = arith.constant dense<0.000000e+00> : vector<64x128xf32>
    %47 = tpu.matmul %45, %46, %cst_22 {dimension_numbers = #tpu.dot_dimension_numbers<[1], [0], [0], [1], [0, 0, 1, 1], [], []>} : vector<64x64xbf16>, vector<64x128xbf16>, vector<64x128xf32> -> vector<64x128xf32>
    %48 = arith.truncf %44 : vector<64x64xf32> to vector<64x64xbf16>
    %c0_23 = arith.constant 0 : index
    %c0_24 = arith.constant 0 : index
    %49 = vector.load %arg7[%c0_23, %c0_24] : memref<64x128xbf16, #tpu.memory_space<vmem>>, vector<64x128xbf16>
    %cst_25 = arith.constant dense<0.000000e+00> : vector<64x128xf32>
    %50 = tpu.matmul %48, %49, %cst_25 {dimension_numbers = #tpu.dot_dimension_numbers<[1], [0], [0], [1], [0, 0, 1, 1], [], []>} : vector<64x64xbf16>, vector<64x128xbf16>, vector<64x128xf32> -> vector<64x128xf32>
    %51 = arith.addf %47, %50 : vector<64x128xf32>
    %c0_26 = arith.constant 0 : index
    %c0_27 = arith.constant 0 : index
    %52 = vector.load %arg8[%c0_26, %c0_27] : memref<64x128xf32, #tpu.memory_space<vmem>>, vector<64x128xf32>
    tpu.vector_store %arg8[%c0_26, %c0_27], %51 {strides = array<i32>} : memref<64x128xf32, #tpu.memory_space<vmem>>, vector<64x128xf32>,
    return
  }
  func.func @transform_0(%arg0: i32) -> (i32, i32, i32, i32) {
    %c0_i32 = arith.constant 0 : i32
    %c0_i32_0 = arith.constant 0 : i32
    %c0_i32_1 = arith.constant 0 : i32
    %c0_i32_2 = arith.constant 0 : i32
    return %arg0, %c0_i32, %c0_i32_0, %c0_i32_1 : i32, i32, i32, i32
  }
  func.func @transform_1(%arg0: i32) -> (i32, i32) {
    %c0_i32 = arith.constant 0 : i32
    %c0_i32_0 = arith.constant 0 : i32
    %c0_i32_1 = arith.constant 0 : i32
    return %c0_i32, %c0_i32_0 : i32, i32
  }
  func.func @transform_2(%arg0: i32) -> (i32, i32) {
    %c0_i32 = arith.constant 0 : i32
    %c0_i32_0 = arith.constant 0 : i32
    %c0_i32_1 = arith.constant 0 : i32
    return %c0_i32, %c0_i32_0 : i32, i32
  }
  func.func @transform_3(%arg0: i32) -> (i32, i32) {
    %c0_i32 = arith.constant 0 : i32
    %c0_i32_0 = arith.constant 0 : i32
    %c0_i32_1 = arith.constant 0 : i32
    return %c0_i32, %c0_i32_0 : i32, i32
  }
  func.func @transform_4(%arg0: i32) -> (i32, i32) {
    %c0_i32 = arith.constant 0 : i32
    %c0_i32_0 = arith.constant 0 : i32
    %c0_i32_1 = arith.constant 0 : i32
    return %c0_i32, %c0_i32_0 : i32, i32
  }
  func.func @transform_5(%arg0: i32) -> (i32, i32) {
    %c0_i32 = arith.constant 0 : i32
    %c0_i32_0 = arith.constant 0 : i32
    %c0_i32_1 = arith.constant 0 : i32
    return %c0_i32, %c0_i32_0 : i32, i32
  }
  func.func @transform_6(%arg0: i32) -> (i32, i32) {
    %c0_i32 = arith.constant 0 : i32
    %c0_i32_0 = arith.constant 0 : i32
    %c0_i32_1 = arith.constant 0 : i32
    return %c0_i32, %c0_i32_0 : i32, i32
  }
  func.func @transform_7(%arg0: i32) -> (i32, i32) {
    %c0_i32 = arith.constant 0 : i32
    %c0_i32_0 = arith.constant 0 : i32
    return %arg0, %c0_i32 : i32, i32
  }
}

</mosaic_0001>

<llo_original>
// kernel: tpu_custom_call.1
$region0: #{tpu_custom_call.1}
  #allocation0 [shape = 'u32[]', space=smem, size = 0x4, offset = 0x4, fixed_abs, tag = 'smem constant byte address 0x4 - core index']
  #allocation1 [shape = 'u32[144,128]{1,0:T(1,128)}', space=vmem, size = 0x12000, scoped, tag = 'internal scratch']
  %s0 = inlined_call_operand.hbm [shape: f32[16,2,8,64], index: 0, kind: input, shape index: {}]
  %s1 = inlined_call_operand.vmem [shape: f32[1,64], index: 1, kind: input, shape index: {}]
  %s2 = inlined_call_operand.vmem [shape: f32[1,64], index: 2, kind: input, shape index: {}]
  %s3 = inlined_call_operand.vmem [shape: f32[1,64], index: 3, kind: input, shape index: {}]
  %s4 = inlined_call_operand.vmem [shape: f32[1,64], index: 4, kind: input, shape index: {}]
  %s5 = inlined_call_operand.hbm [shape: bf16[64,128], index: 5, kind: input, shape index: {}]
  %s6 = inlined_call_operand.hbm [shape: bf16[64,128], index: 6, kind: input, shape index: {}]
  %s7 = inlined_call_operand.hbm [shape: f32[128,128], index: 7, kind: output, shape index: {}]
  %s8 = sld [smem:[#allocation0]]
  $region73: #{tpu_custom_call.1} parent=0
    _
  %s10 = ssub.s32 1, %s8
  %s11 = scalar_select 0, %s10, %s8
  $region1: #{tpu_custom_call.1} parent=0
    #allocation2 [shape = 'u8[131072]{0}', space=vmem, size = 0x20000, scoped, tag = 'input window, operand 0']
    #allocation3 [shape = 's32[2]{0}', space=sflag, size = 0x8, scoped, tag = 'scoped memory for tpu_custom_call.1']
    #allocation4 [shape = 's32[2]{0}', space=sflag, size = 0x8, scoped, tag = 'scoped memory for tpu_custom_call.1']
    #allocation5 [shape = 'u8[16384]{0}', space=vmem, size = 0x4000, scoped, tag = 'input window, operand 5, single buffered']
    #allocation6 [shape = 's32[1]{0}', space=sflag, size = 0x4, scoped, tag = 'scoped memory for tpu_custom_call.1']
    #allocation7 [shape = 'u8[16384]{0}', space=vmem, size = 0x4000, scoped, tag = 'input window, operand 6, single buffered']
    #allocation8 [shape = 'u8[65536]{0}', space=vmem, size = 0x10000, scoped, tag = 'output window, operand 0']
    %12 = vsyncpa [#allocation3], 0
    %s13 = scalar_lea.sflag [#allocation3], 1
    %14 = vsyncpa %s13, 0
    %15 = vsyncpa [#allocation6], 0
    %16 = vsyncpa [#allocation4], 0
    %s17 = scalar_lea.sflag [#allocation4], 1
    %18 = vsyncpa %s17, 0
    loop: start=0, step=1, limit=4
    $region2: #{tpu_custom_call.1} parent=1 // loop_pre_header
      _
    $region3: #{tpu_custom_call.1} parent=1 // loop_header
      %s20 = sphi 0, %s24
      %p21 = scmp.ge.s32.totalorder %s20, 4
      %s30 = sphi 0, %s32
      %s33 = sphi 0, %s30
      %s34 = sphi 0, %s33
      %s50 = sphi 0, %s34
      %s54 = sphi 0, %s54
      %s56 = sphi 0, %s54
      %s57 = sphi 0, %s56
      %s71 = sphi 0, %s57
      %s75 = sphi 0, %s75
      %s77 = sphi 0, %s75
      %s78 = sphi 0, %s77
      %s92 = sphi 0, %s78
      %s96 = sphi 0, %s96
      %s98 = sphi 0, %s96
      %s99 = sphi 0, %s98
      %s113 = sphi 0, %s99
      %s117 = sphi 0, %s117
      %s119 = sphi 0, %s117
      %s120 = sphi 0, %s119
      %s134 = sphi 0, %s120
      %s138 = sphi 0, %s138
      %s140 = sphi 0, %s138
      %s141 = sphi 0, %s140
      %s155 = sphi 0, %s141
      %s159 = sphi 0, %s159
      %s161 = sphi 0, %s159
      %s162 = sphi 0, %s161
      %s176 = sphi 0, %s162
      %s182 = sphi 0, %s184
      %s185 = sphi 0, %s182
      %s186 = sphi 0, %s185
      %s202 = sphi 0, %s186
    $region4: #{tpu_custom_call.1} parent=1 // loop_header_branch
      %23 = sbr.rel (%p21) target = $region8
    $region5: #{tpu_custom_call.1} parent=1 // loop_body
      %s25 = ssub.s32 %s20, 1
      %s26 = ssub.s32 %s20, 2
      %s27 = sadd.s32 %s20, 1
      %s28 = ssub.s32 %s20, %s27
      %p29 = scmp.eq.s32.totalorder %s28, 0
      %s31 = sadd.s32 %s30, 1
      %s32 = scalar_select %p29, %s30, %s31
      %p35 = pneg %p29
      %p36 = scmp.eq.s32.totalorder %s20, 1
      %p37 = por %p35, %p36
      %p38 = scmp.ne.s32.totalorder %s30, %s33
      %p39 = scmp.eq.s32.totalorder %s20, 0
      %p40 = por %p38, %p39
      %p41 = scmp.ne.s32.totalorder %s30, %s33
      %p42 = scmp.eq.s32.totalorder %s25, 1
      %p43 = por %p41, %p42
      %p44 = scmp.ne.s32.totalorder %s33, %s34
      %p45 = scmp.eq.s32.totalorder %s25, 0
      %p46 = por %p44, %p45
      %p47 = scmp.ne.s32.totalorder %s33, %s34
      %p48 = scmp.eq.s32.totalorder %s26, 1
      %p49 = por %p47, %p48
      %p51 = scmp.ne.s32.totalorder %s34, %s50
      %p52 = scmp.eq.s32.totalorder %s26, 0
      %p53 = por %p51, %p52
      %s55 = sadd.s32 %s54, 1
      %p58 = scmp.eq.s32.totalorder %s20, 1
      %p59 = scmp.ne.s32.totalorder %s54, %s56
      %p60 = scmp.eq.s32.totalorder %s20, 0
      %p61 = por %p59, %p60
      %p62 = scmp.ne.s32.totalorder %s54, %s56
      %p63 = scmp.eq.s32.totalorder %s25, 1
      %p64 = por %p62, %p63
      %p65 = scmp.ne.s32.totalorder %s56, %s57
      %p66 = scmp.eq.s32.totalorder %s25, 0
      %p67 = por %p65, %p66
      %p68 = scmp.ne.s32.totalorder %s56, %s57
      %p69 = scmp.eq.s32.totalorder %s26, 1
      %p70 = por %p68, %p69
      %p72 = scmp.ne.s32.totalorder %s57, %s71
      %p73 = scmp.eq.s32.totalorder %s26, 0
      %p74 = por %p72, %p73
      %s76 = sadd.s32 %s75, 1
      %p79 = scmp.eq.s32.totalorder %s20, 1
      %p80 = scmp.ne.s32.totalorder %s75, %s77
      %p81 = scmp.eq.s32.totalorder %s20, 0
      %p82 = por %p80, %p81
      %p83 = scmp.ne.s32.totalorder %s75, %s77
      %p84 = scmp.eq.s32.totalorder %s25, 1
      %p85 = por %p83, %p84
      %p86 = scmp.ne.s32.totalorder %s77, %s78
      %p87 = scmp.eq.s32.totalorder %s25, 0
      %p88 = por %p86, %p87
      %p89 = scmp.ne.s32.totalorder %s77, %s78
      %p90 = scmp.eq.s32.totalorder %s26, 1
      %p91 = por %p89, %p90
      %p93 = scmp.ne.s32.totalorder %s78, %s92
      %p94 = scmp.eq.s32.totalorder %s26, 0
      %p95 = por %p93, %p94
      %s97 = sadd.s32 %s96, 1
      %p100 = scmp.eq.s32.totalorder %s20, 1
      %p101 = scmp.ne.s32.totalorder %s96, %s98
      %p102 = scmp.eq.s32.totalorder %s20, 0
      %p103 = por %p101, %p102
      %p104 = scmp.ne.s32.totalorder %s96, %s98
      %p105 = scmp.eq.s32.totalorder %s25, 1
      %p106 = por %p104, %p105
      %p107 = scmp.ne.s32.totalorder %s98, %s99
      %p108 = scmp.eq.s32.totalorder %s25, 0
      %p109 = por %p107, %p108
      %p110 = scmp.ne.s32.totalorder %s98, %s99
      %p111 = scmp.eq.s32.totalorder %s26, 1
      %p112 = por %p110, %p111
      %p114 = scmp.ne.s32.totalorder %s99, %s113
      %p115 = scmp.eq.s32.totalorder %s26, 0
      %p116 = por %p114, %p115
      %s118 = sadd.s32 %s117, 1
      %p121 = scmp.eq.s32.totalorder %s20, 1
      %p122 = scmp.ne.s32.totalorder %s117, %s119
      %p123 = scmp.eq.s32.totalorder %s20, 0
      %p124 = por %p122, %p123
      %p125 = scmp.ne.s32.totalorder %s117, %s119
      %p126 = scmp.eq.s32.totalorder %s25, 1
      %p127 = por %p125, %p126
      %p128 = scmp.ne.s32.totalorder %s119, %s120
      %p129 = scmp.eq.s32.totalorder %s25, 0
      %p130 = por %p128, %p129
      %p131 = scmp.ne.s32.totalorder %s119, %s120
      %p132 = scmp.eq.s32.totalorder %s26, 1
      %p133 = por %p131, %p132
      %p135 = scmp.ne.s32.totalorder %s120, %s134
      %p136 = scmp.eq.s32.totalorder %s26, 0
      %p137 = por %p135, %p136
      %s139 = sadd.s32 %s138, 1
      %p142 = scmp.eq.s32.totalorder %s20, 1
      %p143 = scmp.ne.s32.totalorder %s138, %s140
      %p144 = scmp.eq.s32.totalorder %s20, 0
      %p145 = por %p143, %p144
      %p146 = scmp.ne.s32.totalorder %s138, %s140
      %p147 = scmp.eq.s32.totalorder %s25, 1
      %p148 = por %p146, %p147
      %p149 = scmp.ne.s32.totalorder %s140, %s141
      %p150 = scmp.eq.s32.totalorder %s25, 0
      %p151 = por %p149, %p150
      %p152 = scmp.ne.s32.totalorder %s140, %s141
      %p153 = scmp.eq.s32.totalorder %s26, 1
      %p154 = por %p152, %p153
      %p156 = scmp.ne.s32.totalorder %s141, %s155
      %p157 = scmp.eq.s32.totalorder %s26, 0
      %p158 = por %p156, %p157
      %s160 = sadd.s32 %s159, 1
      %p163 = scmp.eq.s32.totalorder %s20, 1
      %p164 = scmp.ne.s32.totalorder %s159, %s161
      %p165 = scmp.eq.s32.totalorder %s20, 0
      %p166 = por %p164, %p165
      %p167 = scmp.ne.s32.totalorder %s159, %s161
      %p168 = scmp.eq.s32.totalorder %s25, 1
      %p169 = por %p167, %p168
      %p170 = scmp.ne.s32.totalorder %s161, %s162
      %p171 = scmp.eq.s32.totalorder %s25, 0
      %p172 = por %p170, %p171
      %p173 = scmp.ne.s32.totalorder %s161, %s162
      %p174 = scmp.eq.s32.totalorder %s26, 1
      %p175 = por %p173, %p174
      %p177 = scmp.ne.s32.totalorder %s162, %s176
      %p178 = scmp.eq.s32.totalorder %s26, 0
      %p179 = por %p177, %p178
      %s180 = ssub.s32 %s20, %s27
      %p181 = scmp.eq.s32.totalorder %s180, 0
      %s183 = sadd.s32 %s182, 1
      %s184 = scalar_select %p181, %s182, %s183
      %p187 = pneg %p181
      %p188 = scmp.eq.s32.totalorder %s20, 1
      %p189 = por %p187, %p188
      %p190 = scmp.ne.s32.totalorder %s182, %s185
      %p191 = scmp.eq.s32.totalorder %s20, 0
      %p192 = por %p190, %p191
      %p193 = scmp.ne.s32.totalorder %s182, %s185
      %p194 = scmp.eq.s32.totalorder %s25, 1
      %p195 = por %p193, %p194
      %p196 = scmp.ne.s32.totalorder %s185, %s186
      %p197 = scmp.eq.s32.totalorder %s25, 0
      %p198 = por %p196, %p197
      %p199 = scmp.ne.s32.totalorder %s185, %s186
      %p200 = scmp.eq.s32.totalorder %s26, 1
      %p201 = por %p199, %p200
      %p203 = scmp.ne.s32.totalorder %s186, %s202
      %p204 = scmp.eq.s32.totalorder %s26, 0
      %p205 = por %p203, %p204
      %p206 = scmp.le.s32.totalorder 1, %s20
      %p207 = scmp.lt.s32.totalorder %s20, 3
      %p208 = pnand %p206, %p207
      %p209 = pneg %p208
      // Predicated region
      $region9: #{tpu_custom_call.1} parent=5 // pred_check
        _
      $region10: #{tpu_custom_call.1} parent=5 // pred_check_branch
        %211 = sbr.rel (%p208) target = $region12
      $region11: #{tpu_custom_call.1} parent=5 // pred_region
        %s212 = ssub.s32 %s20, 1
        // Predicated region
        $region13: #{tpu_custom_call.1} parent=11 // pred_check
          %p213 = pneg %p67
        $region14: #{tpu_custom_call.1} parent=11 // pred_check_branch
          %215 = sbr.rel (%p213) target = $region16
        $region15: #{tpu_custom_call.1} parent=11 // pred_region
          _
        $region16: #{tpu_custom_call.1} parent=11 // pred_fallthru
          _
        // Predicated region
        $region17: #{tpu_custom_call.1} parent=11 // pred_check
          %p216 = pneg %p88
        $region18: #{tpu_custom_call.1} parent=11 // pred_check_branch
          %218 = sbr.rel (%p216) target = $region20
        $region19: #{tpu_custom_call.1} parent=11 // pred_region
          _
        $region20: #{tpu_custom_call.1} parent=11 // pred_fallthru
          _
        // Predicated region
        $region21: #{tpu_custom_call.1} parent=11 // pred_check
          %p219 = pneg %p109
        $region22: #{tpu_custom_call.1} parent=11 // pred_check_branch
          %221 = sbr.rel (%p219) target = $region24
        $region23: #{tpu_custom_call.1} parent=11 // pred_region
          _
        $region24: #{tpu_custom_call.1} parent=11 // pred_fallthru
          _
        // Predicated region
        $region25: #{tpu_custom_call.1} parent=11 // pred_check
          %p222 = pneg %p130
        $region26: #{tpu_custom_call.1} parent=11 // pred_check_branch
          %224 = sbr.rel (%p222) target = $region28
        $region27: #{tpu_custom_call.1} parent=11 // pred_region
          _
        $region28: #{tpu_custom_call.1} parent=11 // pred_fallthru
          _
        // Predicated region
        $region29: #{tpu_custom_call.1} parent=11 // pred_check
          %p225 = pneg %p151
        $region30: #{tpu_custom_call.1} parent=11 // pred_check_branch
          %227 = sbr.rel (%p225) target = $region32
        $region31: #{tpu_custom_call.1} parent=11 // pred_region
          %s229 = ssub.s32 512, 512
          %230 = vsyncadd [#allocation6], %s229
          %s231 = sshll.u32 [#allocation5], 4
          %s232 = int_to_ptr.vmem [resolvable:$true] %s231
          %237 = dma.hbm_to_vmem [thread:$0]  %s5, 512, %s232, [#allocation6], 64, 64, 4
        $region32: #{tpu_custom_call.1} parent=11 // pred_fallthru
          _
        // Predicated region
        $region33: #{tpu_custom_call.1} parent=11 // pred_check
          %p238 = pneg %p172
        $region34: #{tpu_custom_call.1} parent=11 // pred_check_branch
          %240 = sbr.rel (%p238) target = $region36
        $region35: #{tpu_custom_call.1} parent=11 // pred_region
          %s242 = ssub.s32 512, 512
          %243 = vsyncadd [#allocation6], %s242
          %s244 = sshll.u32 [#allocation7], 4
          %s245 = int_to_ptr.vmem [resolvable:$true] %s244
          %250 = dma.hbm_to_vmem [thread:$0]  %s6, 512, %s245, [#allocation6], 64, 64, 4
        $region36: #{tpu_custom_call.1} parent=11 // pred_fallthru
          _
      $region12: #{tpu_custom_call.1} parent=5 // pred_fallthru
        _
      %p251 = scmp.lt.s32.totalorder %s20, 2
      // Predicated region
      $region37: #{tpu_custom_call.1} parent=5 // pred_check
        %p252 = pneg %p251
      $region38: #{tpu_custom_call.1} parent=5 // pred_check_branch
        %254 = sbr.rel (%p252) target = $region40
      $region39: #{tpu_custom_call.1} parent=5 // pred_region
        // Predicated region
        $region41: #{tpu_custom_call.1} parent=39 // pred_check
          %p255 = pneg %p40
        $region42: #{tpu_custom_call.1} parent=39 // pred_check_branch
          %257 = sbr.rel (%p255) target = $region44
        $region43: #{tpu_custom_call.1} parent=39 // pred_region
          %s258 = sand.u32 %s30, 1
          %s259 = scalar_lea.sflag [#allocation3], %s258
          %s260 = sand.u32 %s30, 1
          %s261 = smul.addr %s260, 128
          %s262 = scalar_lea.vmem [#allocation2], %s261
          %s263 = smul.u32 8, %s20
          %s265 = ssub.s32 2048, 2048
          %266 = vsyncadd %s259, %s265
          %s267 = smul.addr %s263, 2
          %s268 = smul.addr %s267, 128
          %s269 = scalar_lea.hbm %s0, %s268
          %s270 = sshll.u32 %s262, 4
          %s271 = int_to_ptr.vmem [resolvable:$true] %s270
          %276 = dma.hbm_to_vmem [thread:$0]  %s269, 2048, %s271, %s259, 128, 128, 8
        $region44: #{tpu_custom_call.1} parent=39 // pred_fallthru
          _
      $region40: #{tpu_custom_call.1} parent=5 // pred_fallthru
        _
      %p277 = scmp.le.s32.totalorder 1, %s20
      %p278 = scmp.lt.s32.totalorder %s20, 3
      %p279 = pnand %p277, %p278
      %p280 = pneg %p279
      // Predicated region
      $region45: #{tpu_custom_call.1} parent=5 // pred_check
        _
      $region46: #{tpu_custom_call.1} parent=5 // pred_check_branch
        %282 = sbr.rel (%p279) target = $region48
      $region47: #{tpu_custom_call.1} parent=5 // pred_region
        %s283 = ssub.s32 %s20, 1
        %s284 = sand.u32 %s33, 1
        %s285 = scalar_lea.sflag [#allocation3], %s284
        %s286 = sand.u32 %s33, 1
        %s287 = smul.addr %s286, 128
        %s288 = scalar_lea.vmem [#allocation2], %s287
        // Predicated region
        $region49: #{tpu_custom_call.1} parent=47 // pred_check
          %p289 = pneg %p46
        $region50: #{tpu_custom_call.1} parent=47 // pred_check_branch
          %291 = sbr.rel (%p289) target = $region52
        $region51: #{tpu_custom_call.1} parent=47 // pred_region
          %292 = dma.done %s285, 2048
        $region52: #{tpu_custom_call.1} parent=47 // pred_fallthru
          _
        // Predicated region
        $region53: #{tpu_custom_call.1} parent=47 // pred_check
          %p293 = pneg %p151
        $region54: #{tpu_custom_call.1} parent=47 // pred_check_branch
          %295 = sbr.rel (%p293) target = $region56
        $region55: #{tpu_custom_call.1} parent=47 // pred_region
          %296 = dma.done [#allocation6], 512
        $region56: #{tpu_custom_call.1} parent=47 // pred_fallthru
          _
        // Predicated region
        $region57: #{tpu_custom_call.1} parent=47 // pred_check
          %p297 = pneg %p172
        $region58: #{tpu_custom_call.1} parent=47 // pred_check_branch
          %299 = sbr.rel (%p297) target = $region60
        $region59: #{tpu_custom_call.1} parent=47 // pred_region
          %300 = dma.done [#allocation6], 512
        $region60: #{tpu_custom_call.1} parent=47 // pred_fallthru
          _
        %s301 = sand.u32 %s33, 1
        %s302 = scalar_lea.sflag [#allocation3], %s301
        %s303 = sand.u32 %s33, 1
        %s304 = smul.addr %s303, 128
        %s305 = scalar_lea.vmem [#allocation2], %s304
        %p306 = pneg %p46
        %p307 = pneg %p43
        %p308 = pneg %p67
        %p309 = pneg %p64
        %p310 = pneg %p88
        %p311 = pneg %p85
        %p312 = pneg %p109
        %p313 = pneg %p106
        %p314 = pneg %p130
        %p315 = pneg %p127
        %p316 = pneg %p151
        %p317 = pneg %p148
        %p318 = pneg %p172
        %p319 = pneg %p169
        %p320 = pneg %p198
        %p321 = pneg %p195
        %s322 = sand.u32 %s185, 1
        %s323 = scalar_lea.sflag [#allocation4], %s322
        %s324 = sand.u32 %s185, 1
        %s325 = smul.addr %s324, 64
        %s326 = scalar_lea.vmem [#allocation8], %s325
        %s327 = smul.u32 8, %s25
        %s328 = smul.u32 8, %s25
        %v330 = vld [vmem:[%s288] sm:$0xff]
        %v331 = vld [vmem:[%s288 + $0x10] sm:$0xff]
        %v332 = vld [vmem:[%s288 + $0x20] sm:$0xff]
        %v333 = vld [vmem:[%s288 + $0x30] sm:$0xff]
        %v334 = vld [vmem:[%s288 + $0x40] sm:$0xff]
        %v335 = vld [vmem:[%s288 + $0x50] sm:$0xff]
        %v336 = vld [vmem:[%s288 + $0x60] sm:$0xff]
        %v337 = vld [vmem:[%s288 + $0x70] sm:$0xff]
        %s338 = scalar_lea.vmem %s288, 8 [#allocation2]
        %v339 = vld [vmem:[%s338] sm:$0xff]
        %v340 = vld [vmem:[%s338 + $0x10] sm:$0xff]
        %v341 = vld [vmem:[%s338 + $0x20] sm:$0xff]
        %v342 = vld [vmem:[%s338 + $0x30] sm:$0xff]
        %v343 = vld [vmem:[%s338 + $0x40] sm:$0xff]
        %v344 = vld [vmem:[%s338 + $0x50] sm:$0xff]
        %v345 = vld [vmem:[%s338 + $0x60] sm:$0xff]
        %v346 = vld [vmem:[%s338 + $0x70] sm:$0xff]
        %vm347 = vcmask 523264
        %v348 = vsel %vm347, %v330, 0.0
        %349 = vadd.xlane.f32.xlu0 %v348
        %v350 = vpop.xlane.xlu0 %349
        %v351 = vsel %vm347, %v331, 0.0
        %352 = vadd.xlane.f32.xlu0 %v351
        %v353 = vpop.xlane.xlu0 %352
        %v354 = vsel %vm347, %v332, 0.0
        %355 = vadd.xlane.f32.xlu0 %v354
        %v356 = vpop.xlane.xlu0 %355
        %v357 = vsel %vm347, %v333, 0.0
        %358 = vadd.xlane.f32.xlu0 %v357
        %v359 = vpop.xlane.xlu0 %358
        %v360 = vsel %vm347, %v334, 0.0
        %361 = vadd.xlane.f32.xlu0 %v360
        %v362 = vpop.xlane.xlu0 %361
        %v363 = vsel %vm347, %v335, 0.0
        %364 = vadd.xlane.f32.xlu0 %v363
        %v365 = vpop.xlane.xlu0 %364
        %v366 = vsel %vm347, %v336, 0.0
        %367 = vadd.xlane.f32.xlu0 %v366
        %v368 = vpop.xlane.xlu0 %367
        %v369 = vsel %vm347, %v337, 0.0
        %370 = vadd.xlane.f32.xlu0 %v369
        %v371 = vpop.xlane.xlu0 %370
        %v372 = vsel %vm347, %v339, 0.0
        %373 = vadd.xlane.f32.xlu0 %v372
        %v374 = vpop.xlane.xlu0 %373
        %v375 = vsel %vm347, %v340, 0.0
        %376 = vadd.xlane.f32.xlu0 %v375
        %v377 = vpop.xlane.xlu0 %376
        %v378 = vsel %vm347, %v341, 0.0
        %379 = vadd.xlane.f32.xlu0 %v378
        %v380 = vpop.xlane.xlu0 %379
        %v381 = vsel %vm347, %v342, 0.0
        %382 = vadd.xlane.f32.xlu0 %v381
        %v383 = vpop.xlane.xlu0 %382
        %v384 = vsel %vm347, %v343, 0.0
        %385 = vadd.xlane.f32.xlu0 %v384
        %v386 = vpop.xlane.xlu0 %385
        %v387 = vsel %vm347, %v344, 0.0
        %388 = vadd.xlane.f32.xlu0 %v387
        %v389 = vpop.xlane.xlu0 %388
        %v390 = vsel %vm347, %v345, 0.0
        %391 = vadd.xlane.f32.xlu0 %v390
        %v392 = vpop.xlane.xlu0 %391
        %v393 = vsel %vm347, %v346, 0.0
        %394 = vadd.xlane.f32.xlu0 %v393
        %v395 = vpop.xlane.xlu0 %394
        %v396 = vadd.f32 %v350, %v374
        %v397 = vadd.f32 %v353, %v377
        %v398 = vadd.f32 %v356, %v380
        %v399 = vadd.f32 %v359, %v383
        %v400 = vadd.f32 %v362, %v386
        %v401 = vadd.f32 %v365, %v389
        %v402 = vadd.f32 %v368, %v392
        %v403 = vadd.f32 %v371, %v395
        %v404 = vmul.f32 %v396, 0.0078125
        %v405 = vmul.f32 %v397, 0.0078125
        %v406 = vmul.f32 %v398, 0.0078125
        %v407 = vmul.f32 %v399, 0.0078125
        %v408 = vmul.f32 %v400, 0.0078125
        %v409 = vmul.f32 %v401, 0.0078125
        %v410 = vmul.f32 %v402, 0.0078125
        %v411 = vmul.f32 %v403, 0.0078125
        %v412 = vsub.f32 %v330, %v404
        %v413 = vsub.f32 %v331, %v405
        %v414 = vsub.f32 %v332, %v406
        %v415 = vsub.f32 %v333, %v407
        %v416 = vsub.f32 %v334, %v408
        %v417 = vsub.f32 %v335, %v409
        %v418 = vsub.f32 %v336, %v410
        %v419 = vsub.f32 %v337, %v411
        %v420 = vsub.f32 %v339, %v404
        %v421 = vsub.f32 %v340, %v405
        %v422 = vsub.f32 %v341, %v406
        %v423 = vsub.f32 %v342, %v407
        %v424 = vsub.f32 %v343, %v408
        %v425 = vsub.f32 %v344, %v409
        %v426 = vsub.f32 %v345, %v410
        %v427 = vsub.f32 %v346, %v411
        %v428 = vmul.f32 %v412, %v412
        %v429 = vmul.f32 %v413, %v413
        %v430 = vmul.f32 %v414, %v414
        %v431 = vmul.f32 %v415, %v415
        %v432 = vmul.f32 %v416, %v416
        %v433 = vmul.f32 %v417, %v417
        %v434 = vmul.f32 %v418, %v418
        %v435 = vmul.f32 %v419, %v419
        %v436 = vsel %vm347, %v428, 0.0
        %437 = vadd.xlane.f32.xlu0 %v436
        %v438 = vpop.xlane.xlu0 %437
        %v439 = vsel %vm347, %v429, 0.0
        %440 = vadd.xlane.f32.xlu0 %v439
        %v441 = vpop.xlane.xlu0 %440
        %v442 = vsel %vm347, %v430, 0.0
        %443 = vadd.xlane.f32.xlu0 %v442
        %v444 = vpop.xlane.xlu0 %443
        %v445 = vsel %vm347, %v431, 0.0
        %446 = vadd.xlane.f32.xlu0 %v445
        %v447 = vpop.xlane.xlu0 %446
        %v448 = vsel %vm347, %v432, 0.0
        %449 = vadd.xlane.f32.xlu0 %v448
        %v450 = vpop.xlane.xlu0 %449
        %v451 = vsel %vm347, %v433, 0.0
        %452 = vadd.xlane.f32.xlu0 %v451
        %v453 = vpop.xlane.xlu0 %452
        %v454 = vsel %vm347, %v434, 0.0
        %455 = vadd.xlane.f32.xlu0 %v454
        %v456 = vpop.xlane.xlu0 %455
        %v457 = vsel %vm347, %v435, 0.0
        %458 = vadd.xlane.f32.xlu0 %v457
        %v459 = vpop.xlane.xlu0 %458
        %v460 = vmul.f32 %v420, %v420
        %v461 = vmul.f32 %v421, %v421
        %v462 = vmul.f32 %v422, %v422
        %v463 = vmul.f32 %v423, %v423
        %v464 = vmul.f32 %v424, %v424
        %v465 = vmul.f32 %v425, %v425
        %v466 = vmul.f32 %v426, %v426
        %v467 = vmul.f32 %v427, %v427
        %v468 = vsel %vm347, %v460, 0.0
        %469 = vadd.xlane.f32.xlu0 %v468
        %v470 = vpop.xlane.xlu0 %469
        %v471 = vsel %vm347, %v461, 0.0
        %472 = vadd.xlane.f32.xlu0 %v471
        %v473 = vpop.xlane.xlu0 %472
        %v474 = vsel %vm347, %v462, 0.0
        %475 = vadd.xlane.f32.xlu0 %v474
        %v476 = vpop.xlane.xlu0 %475
        %v477 = vsel %vm347, %v463, 0.0
        %478 = vadd.xlane.f32.xlu0 %v477
        %v479 = vpop.xlane.xlu0 %478
        %v480 = vsel %vm347, %v464, 0.0
        %481 = vadd.xlane.f32.xlu0 %v480
        %v482 = vpop.xlane.xlu0 %481
        %v483 = vsel %vm347, %v465, 0.0
        %484 = vadd.xlane.f32.xlu0 %v483
        %v485 = vpop.xlane.xlu0 %484
        %v486 = vsel %vm347, %v466, 0.0
        %487 = vadd.xlane.f32.xlu0 %v486
        %v488 = vpop.xlane.xlu0 %487
        %v489 = vsel %vm347, %v467, 0.0
        %490 = vadd.xlane.f32.xlu0 %v489
        %v491 = vpop.xlane.xlu0 %490
        %v492 = vadd.f32 %v438, %v470
        %v493 = vadd.f32 %v441, %v473
        %v494 = vadd.f32 %v444, %v476
        %v495 = vadd.f32 %v447, %v479
        %v496 = vadd.f32 %v450, %v482
        %v497 = vadd.f32 %v453, %v485
        %v498 = vadd.f32 %v456, %v488
        %v499 = vadd.f32 %v459, %v491
        %v500 = vmul.f32 %v492, 0.0078125
        %v501 = vmul.f32 %v493, 0.0078125
        %v502 = vmul.f32 %v494, 0.0078125
        %v503 = vmul.f32 %v495, 0.0078125
        %v504 = vmul.f32 %v496, 0.0078125
        %v505 = vmul.f32 %v497, 0.0078125
        %v506 = vmul.f32 %v498, 0.0078125
        %v507 = vmul.f32 %v499, 0.0078125
        %v508 = vadd.f32 %v500, 1e-05
        %v509 = vadd.f32 %v501, 1e-05
        %v510 = vadd.f32 %v502, 1e-05
        %v511 = vadd.f32 %v503, 1e-05
        %v512 = vadd.f32 %v504, 1e-05
        %v513 = vadd.f32 %v505, 1e-05
        %v514 = vadd.f32 %v506, 1e-05
        %v515 = vadd.f32 %v507, 1e-05
        %v516 = vrsqrt.pop %v508
        %v517 = vrsqrt.pop %v509
        %v518 = vrsqrt.pop %v510
        %v519 = vrsqrt.pop %v511
        %v520 = vrsqrt.pop %v512
        %v521 = vrsqrt.pop %v513
        %v522 = vrsqrt.pop %v514
        %v523 = vrsqrt.pop %v515
        %v524 = vmul.f32 %v412, %v516
        %v525 = vmul.f32 %v413, %v517
        %v526 = vmul.f32 %v414, %v518
        %v527 = vmul.f32 %v415, %v519
        %v528 = vmul.f32 %v416, %v520
        %v529 = vmul.f32 %v417, %v521
        %v530 = vmul.f32 %v418, %v522
        %v531 = vmul.f32 %v419, %v523
        %v532 = vld [vmem:[%s1] sm:$0x1]
        %v534 = vlaneseq
        %v535 = vshrl.u32 %v534, 7
        %v536 = vsub.s32 0, %v535
        %v537 = vrot.slane %v532, %v536
        %v539 = vmul.f32 %v524, %v537
        %v540 = vmul.f32 %v525, %v537
        %v541 = vmul.f32 %v526, %v537
        %v542 = vmul.f32 %v527, %v537
        %v543 = vmul.f32 %v528, %v537
        %v544 = vmul.f32 %v529, %v537
        %v545 = vmul.f32 %v530, %v537
        %v546 = vmul.f32 %v531, %v537
        %v547 = vld [vmem:[%s3] sm:$0x1]
        %v549 = vlaneseq
        %v550 = vshrl.u32 %v549, 7
        %v551 = vsub.s32 0, %v550
        %v552 = vrot.slane %v547, %v551
        %v554 = vadd.f32 %v539, %v552
        %v555 = vadd.f32 %v540, %v552
        %v556 = vadd.f32 %v541, %v552
        %v557 = vadd.f32 %v542, %v552
        %v558 = vadd.f32 %v543, %v552
        %v559 = vadd.f32 %v544, %v552
        %v560 = vadd.f32 %v545, %v552
        %v561 = vadd.f32 %v546, %v552
        %v562 = vmul.f32 %v420, %v516
        %v563 = vmul.f32 %v421, %v517
        %v564 = vmul.f32 %v422, %v518
        %v565 = vmul.f32 %v423, %v519
        %v566 = vmul.f32 %v424, %v520
        %v567 = vmul.f32 %v425, %v521
        %v568 = vmul.f32 %v426, %v522
        %v569 = vmul.f32 %v427, %v523
        %v570 = vld [vmem:[%s2] sm:$0x1]
        %v572 = vlaneseq
        %v573 = vshrl.u32 %v572, 7
        %v574 = vsub.s32 0, %v573
        %v575 = vrot.slane %v570, %v574
        %v577 = vmul.f32 %v562, %v575
        %v578 = vmul.f32 %v563, %v575
        %v579 = vmul.f32 %v564, %v575
        %v580 = vmul.f32 %v565, %v575
        %v581 = vmul.f32 %v566, %v575
        %v582 = vmul.f32 %v567, %v575
        %v583 = vmul.f32 %v568, %v575
        %v584 = vmul.f32 %v569, %v575
        %v585 = vld [vmem:[%s4] sm:$0x1]
        %v587 = vlaneseq
        %v588 = vshrl.u32 %v587, 7
        %v589 = vsub.s32 0, %v588
        %v590 = vrot.slane %v585, %v589
        %v592 = vadd.f32 %v577, %v590
        %v593 = vadd.f32 %v578, %v590
        %v594 = vadd.f32 %v579, %v590
        %v595 = vadd.f32 %v580, %v590
        %v596 = vadd.f32 %v581, %v590
        %v597 = vadd.f32 %v582, %v590
        %v598 = vadd.f32 %v583, %v590
        %v599 = vadd.f32 %v584, %v590
        %v600 = vpack.c.bf16 %v555, %v554
        %v601 = vpack.c.bf16 %v557, %v556
        %v602 = vpack.c.bf16 %v559, %v558
        %v603 = vpack.c.bf16 %v561, %v560
        %v604 = vld [vmem:[#allocation5] sm:$0xf]
        %v605 = vld [vmem:[#allocation5 + $0x4] sm:$0xf]
        %v606 = vld [vmem:[#allocation5 + $0x8] sm:$0xf]
        %v607 = vld [vmem:[#allocation5 + $0xc] sm:$0xf]
        %v608 = vld [vmem:[#allocation5 + $0x10] sm:$0xf]
        %v609 = vld [vmem:[#allocation5 + $0x14] sm:$0xf]
        %v610 = vld [vmem:[#allocation5 + $0x18] sm:$0xf]
        %v611 = vld [vmem:[#allocation5 + $0x1c] sm:$0xf]
        %v612 = vpack.c.bf16 %v593, %v592
        %v613 = vpack.c.bf16 %v595, %v594
        %v614 = vpack.c.bf16 %v597, %v596
        %v615 = vpack.c.bf16 %v599, %v598
        %v616 = vld [vmem:[#allocation7] sm:$0xf]
        %v617 = vld [vmem:[#allocation7 + $0x4] sm:$0xf]
        %v618 = vld [vmem:[#allocation7 + $0x8] sm:$0xf]
        %v619 = vld [vmem:[#allocation7 + $0xc] sm:$0xf]
        %v620 = vld [vmem:[#allocation7 + $0x10] sm:$0xf]
        %v621 = vld [vmem:[#allocation7 + $0x14] sm:$0xf]
        %v622 = vld [vmem:[#allocation7 + $0x18] sm:$0xf]
        %v623 = vld [vmem:[#allocation7 + $0x1c] sm:$0xf]
        %v632 = vunpack.c.l.b16 %v616
        %v633 = vunpack.c.l.b16 %v617
        %v634 = vunpack.c.l.b16 %v618
        %v635 = vunpack.c.l.b16 %v619
        %v636 = vunpack.c.l.b16 %v620
        %v637 = vunpack.c.l.b16 %v621
        %v638 = vunpack.c.l.b16 %v622
        %v639 = vunpack.c.l.b16 %v623
        %v640 = vpack.c.b16 %v633, %v632
        %v641 = vpack.c.b16 %v635, %v634
        %v642 = vpack.c.b16 %v637, %v636
        %v643 = vpack.c.b16 %v639, %v638
        %v649 = vsel %vm347, %v612, 0
        %v652 = vsel %vm347, %v613, 0
        %v655 = vsel %vm347, %v614, 0
        %v658 = vsel %vm347, %v615, 0
        %660 = vmatprep.subr.bf16.mxu0 0
        %661 = vmatpush1.bf16.msra.mxu0 0
        %662 = vmatprep.subr.bf16.mxu0 0
        %663 = vmatpush1.bf16.msra.mxu0 0
        %664 = vmatprep.subr.bf16.mxu0 0
        %665 = vmatpush1.bf16.msra.mxu0 0
        %666 = vmatprep.subr.bf16.mxu0 0
        %667 = vmatpush1.bf16.msra.mxu0 0
        %668 = vmatprep.subr.bf16.mxu0 0
        %669 = vmatpush1.bf16.msra.mxu0 %v643
        %670 = vmatprep.subr.bf16.mxu0 0
        %671 = vmatpush1.bf16.msra.mxu0 %v642
        %672 = vmatprep.subr.bf16.mxu0 0
        %673 = vmatpush1.bf16.msra.mxu0 %v641
        %674 = vmatprep.subr.bf16.mxu0 0
        %675 = vmatpush1.bf16.msra.mxu0 %v640
        %676 = vmatprep.subr.bf16.mxu0 0
        %677 = vmatpush2.bf16.msra.mxu0 0
        %678 = vmatprep.subr.bf16.mxu0 0
        %679 = vmatpush2.bf16.msra.mxu0 0
        %680 = vmatprep.subr.bf16.mxu0 0
        %681 = vmatpush2.bf16.msra.mxu0 0
        %682 = vmatprep.subr.bf16.mxu0 0
        %683 = vmatpush2.bf16.msra.mxu0 0
        %684 = vmatprep.subr.bf16.mxu0 0
        %685 = vmatpush2.bf16.msra.mxu0 0
        %686 = vmatprep.subr.bf16.mxu0 0
        %687 = vmatpush2.bf16.msra.mxu0 0
        %688 = vmatprep.subr.bf16.mxu0 0
        %689 = vmatpush2.bf16.msra.mxu0 0
        %690 = vmatprep.subr.bf16.mxu0 0
        %691 = vmatpush2.bf16.msra.mxu0 0
        %692 = vmatprep.mubr.bf16.mxu0 0
        %693 = vmatmul.mubr.bf16.gmra.mxu0 %v649
        %v694 = vpop.f32.mrf.mxu0
        %v695 = vadd.f32 0.0, %v694
        %v696 = vpop.f32.mrf.mxu0
        %v697 = vpop.f32.mrf.mxu0
        %v698 = vadd.f32 0.0, %v697
        %v699 = vpop.f32.mrf.mxu0
        %700 = vmatprep.mubr.bf16.mxu0 0
        %701 = vmatmul.mubr.bf16.gmra.mxu0 %v652
        %v702 = vpop.f32.mrf.mxu0
        %v703 = vadd.f32 0.0, %v702
        %v704 = vpop.f32.mrf.mxu0
        %v705 = vpop.f32.mrf.mxu0
        %v706 = vadd.f32 0.0, %v705
        %v707 = vpop.f32.mrf.mxu0
        %708 = vmatprep.mubr.bf16.mxu0 0
        %709 = vmatmul.mubr.bf16.gmra.mxu0 %v655
        %v710 = vpop.f32.mrf.mxu0
        %v711 = vadd.f32 0.0, %v710
        %v712 = vpop.f32.mrf.mxu0
        %v713 = vpop.f32.mrf.mxu0
        %v714 = vadd.f32 0.0, %v713
        %v715 = vpop.f32.mrf.mxu0
        %716 = vmatprep.mubr.bf16.mxu0 0
        %717 = vmatmul.mubr.bf16.gmra.mxu0 %v658
        %v718 = vpop.f32.mrf.mxu0
        %v719 = vadd.f32 0.0, %v718
        %v720 = vpop.f32.mrf.mxu0
        %v721 = vpop.f32.mrf.mxu0
        %v722 = vadd.f32 0.0, %v721
        %v723 = vpop.f32.mrf.mxu0
        %724 = vdwg.mxu0
        %v733 = vunpack.c.l.b16 %v604
        %v734 = vunpack.c.l.b16 %v605
        %v735 = vunpack.c.l.b16 %v606
        %v736 = vunpack.c.l.b16 %v607
        %v737 = vunpack.c.l.b16 %v608
        %v738 = vunpack.c.l.b16 %v609
        %v739 = vunpack.c.l.b16 %v610
        %v740 = vunpack.c.l.b16 %v611
        %v741 = vpack.c.b16 %v734, %v733
        %v742 = vpack.c.b16 %v736, %v735
        %v743 = vpack.c.b16 %v738, %v737
        %v744 = vpack.c.b16 %v740, %v739
        %v750 = vsel %vm347, %v600, 0
        %v753 = vsel %vm347, %v601, 0
        %v756 = vsel %vm347, %v602, 0
        %v759 = vsel %vm347, %v603, 0
        %761 = vmatprep.subr.bf16.mxu0 0
        %762 = vmatpush1.bf16.msra.mxu0 0
        %763 = vmatprep.subr.bf16.mxu0 0
        %764 = vmatpush1.bf16.msra.mxu0 0
        %765 = vmatprep.subr.bf16.mxu0 0
        %766 = vmatpush1.bf16.msra.mxu0 0
        %767 = vmatprep.subr.bf16.mxu0 0
        %768 = vmatpush1.bf16.msra.mxu0 0
        %769 = vmatprep.subr.bf16.mxu0 0
        %770 = vmatpush1.bf16.msra.mxu0 %v744
        %771 = vmatprep.subr.bf16.mxu0 0
        %772 = vmatpush1.bf16.msra.mxu0 %v743
        %773 = vmatprep.subr.bf16.mxu0 0
        %774 = vmatpush1.bf16.msra.mxu0 %v742
        %775 = vmatprep.subr.bf16.mxu0 0
        %776 = vmatpush1.bf16.msra.mxu0 %v741
        %777 = vmatprep.subr.bf16.mxu0 0
        %778 = vmatpush2.bf16.msra.mxu0 0
        %779 = vmatprep.subr.bf16.mxu0 0
        %780 = vmatpush2.bf16.msra.mxu0 0
        %781 = vmatprep.subr.bf16.mxu0 0
        %782 = vmatpush2.bf16.msra.mxu0 0
        %783 = vmatprep.subr.bf16.mxu0 0
        %784 = vmatpush2.bf16.msra.mxu0 0
        %785 = vmatprep.subr.bf16.mxu0 0
        %786 = vmatpush2.bf16.msra.mxu0 0
        %787 = vmatprep.subr.bf16.mxu0 0
        %788 = vmatpush2.bf16.msra.mxu0 0
        %789 = vmatprep.subr.bf16.mxu0 0
        %790 = vmatpush2.bf16.msra.mxu0 0
        %791 = vmatprep.subr.bf16.mxu0 0
        %792 = vmatpush2.bf16.msra.mxu0 0
        %793 = vmatprep.mubr.bf16.mxu0 0
        %794 = vmatmul.mubr.bf16.gmra.mxu0 %v750
        %v795 = vpop.f32.mrf.mxu0
        %v796 = vadd.f32 %v695, %v795
        %v797 = vpop.f32.mrf.mxu0
        %v798 = vpop.f32.mrf.mxu0
        %v799 = vadd.f32 %v698, %v798
        %v800 = vpop.f32.mrf.mxu0
        %801 = vmatprep.mubr.bf16.mxu0 0
        %802 = vmatmul.mubr.bf16.gmra.mxu0 %v753
        %v803 = vpop.f32.mrf.mxu0
        %v804 = vadd.f32 %v703, %v803
        %v805 = vpop.f32.mrf.mxu0
        %v806 = vpop.f32.mrf.mxu0
        %v807 = vadd.f32 %v706, %v806
        %v808 = vpop.f32.mrf.mxu0
        %809 = vmatprep.mubr.bf16.mxu0 0
        %810 = vmatmul.mubr.bf16.gmra.mxu0 %v756
        %v811 = vpop.f32.mrf.mxu0
        %v812 = vadd.f32 %v711, %v811
        %v813 = vpop.f32.mrf.mxu0
        %v814 = vpop.f32.mrf.mxu0
        %v815 = vadd.f32 %v714, %v814
        %v816 = vpop.f32.mrf.mxu0
        %817 = vmatprep.mubr.bf16.mxu0 0
        %818 = vmatmul.mubr.bf16.gmra.mxu0 %v759
        %v819 = vpop.f32.mrf.mxu0
        %v820 = vadd.f32 %v719, %v819
        %v821 = vpop.f32.mrf.mxu0
        %v822 = vpop.f32.mrf.mxu0
        %v823 = vadd.f32 %v722, %v822
        %v824 = vpop.f32.mrf.mxu0
        %825 = vdwg.mxu0
        %826 = vst [vmem:[%s326] sm:$0xff] %v796
        %827 = vst [vmem:[%s326 + $0x8] sm:$0xff] %v799
        %828 = vst [vmem:[%s326 + $0x10] sm:$0xff] %v804
        %829 = vst [vmem:[%s326 + $0x18] sm:$0xff] %v807
        %830 = vst [vmem:[%s326 + $0x20] sm:$0xff] %v812
        %831 = vst [vmem:[%s326 + $0x28] sm:$0xff] %v815
        %832 = vst [vmem:[%s326 + $0x30] sm:$0xff] %v820
        %833 = vst [vmem:[%s326 + $0x38] sm:$0xff] %v823
        %s834 = sand.u32 %s185, 1
        %s835 = scalar_lea.sflag [#allocation4], %s834
        %s836 = sand.u32 %s185, 1
        %s837 = smul.addr %s836, 64
        %s838 = scalar_lea.vmem [#allocation8], %s837
        // Predicated region
        $region61: #{tpu_custom_call.1} parent=47 // pred_check
          %p839 = pneg %p195
        $region62: #{tpu_custom_call.1} parent=47 // pred_check_branch
          %841 = sbr.rel (%p839) target = $region64
        $region63: #{tpu_custom_call.1} parent=47 // pred_region
          %s842 = smul.u32 8, %s25
          %s844 = ssub.s32 1024, 1024
          %845 = vsyncadd %s835, %s844
          %s846 = smul.addr %s842, 128
          %s847 = scalar_lea.hbm %s7, %s846
          %s848 = sshll.u32 %s838, 4
          %s849 = int_to_ptr.vmem [resolvable:$true] %s848
          %854 = dma.vmem_to_hbm [thread:$0]  %s849, 1024, %s847, %s835, 128, 128, 8
        $region64: #{tpu_custom_call.1} parent=47 // pred_fallthru
          _
      $region48: #{tpu_custom_call.1} parent=5 // pred_fallthru
        _
      %p855 = scmp.le.s32.totalorder 2, %s20
      // Predicated region
      $region65: #{tpu_custom_call.1} parent=5 // pred_check
        %p856 = pneg %p855
      $region66: #{tpu_custom_call.1} parent=5 // pred_check_branch
        %858 = sbr.rel (%p856) target = $region68
      $region67: #{tpu_custom_call.1} parent=5 // pred_region
        %s859 = ssub.s32 %s20, 2
        // Predicated region
        $region69: #{tpu_custom_call.1} parent=67 // pred_check
          %p860 = pneg %p201
        $region70: #{tpu_custom_call.1} parent=67 // pred_check_branch
          %862 = sbr.rel (%p860) target = $region72
        $region71: #{tpu_custom_call.1} parent=67 // pred_region
          %s863 = sand.u32 %s186, 1
          %s864 = scalar_lea.sflag [#allocation4], %s863
          %s865 = sand.u32 %s186, 1
          %s866 = smul.addr %s865, 64
          %s867 = scalar_lea.vmem [#allocation8], %s866
          %868 = dma.done %s864, 1024
        $region72: #{tpu_custom_call.1} parent=67 // pred_fallthru
          _
      $region68: #{tpu_custom_call.1} parent=5 // pred_fallthru
        _
    $region6: #{tpu_custom_call.1} parent=1 // loop_footer
      %s24 = sadd.s32 1, %s20
    $region7: #{tpu_custom_call.1} parent=1 // loop_footer_branch
      %19 = sbr.rel target = $region3
    $region8: #{tpu_custom_call.1} parent=1 // loop_exit
      _
    %869 = vsyncpa [#allocation3], 1
    %s870 = scalar_lea.sflag [#allocation3], 1
    %871 = vsyncpa %s870, 1
    %872 = vsyncpa [#allocation6], 1
    %873 = vsyncpa [#allocation4], 1
    %s874 = scalar_lea.sflag [#allocation4], 1
    %875 = vsyncpa %s874, 1

</llo_original>
